<compile_context>
chip_gen: v5e
topology: v5e:2x2
jax: 0.10.0
libtpu: 0.0.40
codegen_flags: <defaults>
</compile_context>

<pallas_src>
import functools

import jax
import jax.numpy as jnp
from jax.experimental import pallas as pl
from jax.experimental.pallas import tpu as pltpu

_LANES = 128
_SMALL_FALLBACK_ELEMS = 64 * 1024   # below this, plain JAX fused max wins
_VMEM_BUDGET = 24 << 20             # target double-buffer footprint
_VMEM_LIMIT = 40 << 20              # scoped-VMEM limit (headroom on v7x 64 MiB)
_MEGACORE_MIN_ROWS = 4096           # force >= 2 grid steps above this
_MAX_KERNEL_INPUTS = 8              # group-reduce above this many inputs


def _make_max_kernel(n):
    """Kernel over n input refs + 1 output ref: elementwise max chain."""

    def kernel(*refs):
        acc = refs[0][...]
        for r in refs[1:n]:
            acc = jnp.maximum(acc, r[...])
        refs[n][...] = acc

    return kernel


def _pallas_max_2d(slabs, rows, dtype):
    """Elementwise max of n [rows, 128] slabs via a row-tiled Pallas kernel."""
    n = len(slabs)
    itemsize = jnp.dtype(dtype).itemsize
    sublane = max(8, 32 // itemsize)          # f32 -> 8, bf16 -> 16, int8 -> 32

    # Row-tile cap so (n inputs + 1 output) * 2 buffers fit the VMEM budget.
    bytes_per_row = (2 * n + 2) * _LANES * itemsize
    tr_cap = max(sublane, (_VMEM_BUDGET // bytes_per_row) // sublane * sublane)

    # Keep the tile <= rows (floor to sublane); ragged last block is handled
    # by Pallas boundary masking (elementwise op -> garbage rows never leak).
    tr_full = max(sublane, (rows // sublane) * sublane)
    tr = min(tr_full, tr_cap)

    # v7x megacore: with a single grid step one TensorCore idles.  For big
    # slabs cap the tile at ~half the rows so "parallel" has >= 2 steps.
    if rows >= _MEGACORE_MIN_ROWS:
        half = max(sublane, (-(-((rows + 1) // 2) // sublane)) * sublane)
        tr = min(tr, half)

    grid = (pl.cdiv(rows, tr),)

    return pl.pallas_call(
        _make_max_kernel(n),
        out_shape=jax.ShapeDtypeStruct((rows, _LANES), dtype),
        grid_spec=pltpu.PrefetchScalarGridSpec(
            num_scalar_prefetch=0,
            grid=grid,
            in_specs=[
                pl.BlockSpec((tr, _LANES), lambda i: (i, 0)) for _ in range(n)
            ],
            out_specs=pl.BlockSpec((tr, _LANES), lambda i: (i, 0)),
        ),
        compiler_params=pltpu.CompilerParams(
            dimension_semantics=("parallel",),
            vmem_limit_bytes=_VMEM_LIMIT,
        ),
        cost_estimate=pl.CostEstimate(
            flops=(n - 1) * rows * _LANES,
            bytes_accessed=(n + 1) * rows * _LANES * itemsize,
            transcendentals=0,
        ),
    )(*slabs)


def max_layer(inputs):
    """Elementwise maximum over a Mapping[str, Array] of same-shape arrays."""
    vals = list(inputs.values())
    n = len(vals)
    if n == 0:
        raise ValueError("MaxLayer requires at least one input tensor")
    shape = vals[0].shape
    dtype = vals[0].dtype
    for v in vals:
        assert v.shape == shape and v.dtype == dtype, "inputs must match"
    if n == 1:
        return vals[0]

    total = 1
    for d in shape:
        total *= int(d)

    # Small tensors: kernel launch overhead dwarfs the work.
    if total < _SMALL_FALLBACK_ELEMS:
        return functools.reduce(jnp.maximum, vals)

    # Many inputs: reduce in groups so (2n+2) double-buffers keep tiles large.
    if n > _MAX_KERNEL_INPUTS:
        partials = []
        for i in range(0, n, _MAX_KERNEL_INPUTS):
            chunk = {str(j): v for j, v in enumerate(vals[i:i + _MAX_KERNEL_INPUTS])}
            partials.append(max_layer(chunk))
        return max_layer({str(j): p for j, p in enumerate(partials)})

    if total % _LANES == 0:
        # Fast path: free reshape to lane-dense slabs, no pad, no output trim.
        rows = total // _LANES
        slabs = [v.reshape(rows, _LANES) for v in vals]
        out2d = _pallas_max_2d(slabs, rows, dtype)
        return out2d.reshape(shape)

    # Ragged: kernel on the largest 128-aligned prefix, plain max on the tail.
    bulk = (total // _LANES) * _LANES
    rows = bulk // _LANES
    flats = [v.reshape(-1) for v in vals]
    slabs = [f[:bulk].reshape(rows, _LANES) for f in flats]
    out_bulk = _pallas_max_2d(slabs, rows, dtype).reshape(-1)
    out_tail = functools.reduce(jnp.maximum, [f[bulk:] for f in flats])
    return jnp.concatenate([out_bulk, out_tail]).reshape(shape)


if __name__ == "__main__":

    def check(shape, n_inputs, seed):
        keys = jax.random.split(jax.random.PRNGKey(seed), n_inputs)
        inputs = {
            f"t{i}": jax.random.normal(k, shape, dtype=jnp.float32)
            for i, k in enumerate(keys)
        }
        out = jax.block_until_ready(max_layer(inputs))
        ref = jnp.max(jnp.stack(list(inputs.values())), axis=0)
        assert out.shape == ref.shape, f"shape mismatch for {shape}"
        assert out.dtype == ref.dtype, f"dtype mismatch for {shape}"
        assert jnp.allclose(out, ref), f"value mismatch for {shape}"

    # Module-style small NCHW input (2048 elems) -> plain-JAX fallback path.
    check((2, 4, 16, 16), 3, seed=0)
    # 128-aligned slab (131072 elems) -> Pallas kernel fast path.
    check((4, 8, 64, 64), 3, seed=0)
    # Ragged total (66822 elems, not %128) -> Pallas prefix + jnp.maximum tail.
    check((2, 259, 129), 3, seed=0)

    print("KERNEL_OK")
</pallas_src>

<mosaic_0001>
module attributes {stable_mosaic.version = 11 : i64} {
  func.func @kernel(%arg0: i32, %arg1: memref<1024x128xf32, #tpu.memory_space<vmem>>, %arg2: memref<1024x128xf32, #tpu.memory_space<vmem>>, %arg3: memref<1024x128xf32, #tpu.memory_space<vmem>>, %arg4: memref<1024x128xf32, #tpu.memory_space<vmem>>) attributes {dimension_semantics = [#tpu.dimension_semantics<parallel>], iteration_bounds = array<i64: 1>, scalar_prefetch = 0 : i64, scratch_operands = 0 : i64, tpu.core_type = #tpu.core_type<tc>, window_params = [{transform_indices = @transform_0, window_bounds = array<i64: 1024, 128>}, {transform_indices = @transform_1, window_bounds = array<i64: 1024, 128>}, {transform_indices = @transform_2, window_bounds = array<i64: 1024, 128>}, {transform_indices = @transform_3, window_bounds = array<i64: 1024, 128>}]} {
    %c0 = arith.constant 0 : index
    %c0_0 = arith.constant 0 : index
    %0 = vector.load %arg1[%c0, %c0_0] : memref<1024x128xf32, #tpu.memory_space<vmem>>, vector<1024x128xf32>
    %c0_1 = arith.constant 0 : index
    %c0_2 = arith.constant 0 : index
    %1 = vector.load %arg2[%c0_1, %c0_2] : memref<1024x128xf32, #tpu.memory_space<vmem>>, vector<1024x128xf32>
    %2 = arith.maximumf %0, %1 : vector<1024x128xf32>
    %c0_3 = arith.constant 0 : index
    %c0_4 = arith.constant 0 : index
    %3 = vector.load %arg3[%c0_3, %c0_4] : memref<1024x128xf32, #tpu.memory_space<vmem>>, vector<1024x128xf32>
    %4 = arith.maximumf %2, %3 : vector<1024x128xf32>
    %c0_5 = arith.constant 0 : index
    %c0_6 = arith.constant 0 : index
    %5 = vector.load %arg4[%c0_5, %c0_6] : memref<1024x128xf32, #tpu.memory_space<vmem>>, vector<1024x128xf32>
    tpu.vector_store %arg4[%c0_5, %c0_6], %4 {strides = array<i32>} : memref<1024x128xf32, #tpu.memory_space<vmem>>, vector<1024x128xf32>,
    return
  }
  func.func @transform_0(%arg0: i32) -> (i32, i32) {
    %c0_i32 = arith.constant 0 : i32
    %c0_i32_0 = arith.constant 0 : i32
    return %arg0, %c0_i32 : i32, i32
  }
  func.func @transform_1(%arg0: i32) -> (i32, i32) {
    %c0_i32 = arith.constant 0 : i32
    %c0_i32_0 = arith.constant 0 : i32
    return %arg0, %c0_i32 : i32, i32
  }
  func.func @transform_2(%arg0: i32) -> (i32, i32) {
    %c0_i32 = arith.constant 0 : i32
    %c0_i32_0 = arith.constant 0 : i32
    return %arg0, %c0_i32 : i32, i32
  }
  func.func @transform_3(%arg0: i32) -> (i32, i32) {
    %c0_i32 = arith.constant 0 : i32
    %c0_i32_0 = arith.constant 0 : i32
    return %arg0, %c0_i32 : i32, i32
  }
}

</mosaic_0001>

<llo_original>
// kernel: tpu_custom_call.1
$region0: #{tpu_custom_call.1}
  #allocation0 [shape = 'u32[]', space=smem, size = 0x4, offset = 0x4, fixed_abs, tag = 'smem constant byte address 0x4 - core index']
  #allocation1 [shape = 'u32[72,128]{1,0:T(1,128)}', space=vmem, size = 0x9000, scoped, tag = 'internal scratch']
  %s0 = inlined_call_operand.hbm [shape: f32[1024,128], index: 0, kind: input, shape index: {}]
  %s1 = inlined_call_operand.hbm [shape: f32[1024,128], index: 1, kind: input, shape index: {}]
  %s2 = inlined_call_operand.hbm [shape: f32[1024,128], index: 2, kind: input, shape index: {}]
  %s3 = inlined_call_operand.hbm [shape: f32[1024,128], index: 3, kind: output, shape index: {}]
  %s4 = sld [smem:[#allocation0]]
  $region34: #{tpu_custom_call.1} parent=0
    _
  %s6 = ssub.s32 1, %s4
  %s7 = scalar_select 0, %s6, %s4
  $region1: #{tpu_custom_call.1} parent=0
    #allocation2 [shape = 'u8[524288]{0}', space=vmem, size = 0x80000, scoped, tag = 'input window, operand 0, single buffered']
    #allocation3 [shape = 's32[1]{0}', space=sflag, size = 0x4, scoped, tag = 'scoped memory for tpu_custom_call.1']
    #allocation4 [shape = 's32[1]{0}', space=sflag, size = 0x4, scoped, tag = 'scoped memory for tpu_custom_call.1']
    #allocation5 [shape = 'u8[524288]{0}', space=vmem, size = 0x80000, scoped, tag = 'input window, operand 1, single buffered']
    #allocation6 [shape = 's32[1]{0}', space=sflag, size = 0x4, scoped, tag = 'scoped memory for tpu_custom_call.1']
    #allocation7 [shape = 'u8[524288]{0}', space=vmem, size = 0x80000, scoped, tag = 'input window, operand 2, single buffered']
    #allocation8 [shape = 'u8[524288]{0}', space=vmem, size = 0x80000, scoped, tag = 'output window, operand 0, single buffered']
    %8 = vsyncpa [#allocation3], 0
    %9 = vsyncpa [#allocation6], 0
    %10 = vsyncpa [#allocation4], 0
    // Predicated region
    $region2: #{tpu_custom_call.1} parent=1 // pred_check
      _
    $region3: #{tpu_custom_call.1} parent=1 // pred_check_branch
      %12 = sbr.rel (0) target = $region5
    $region4: #{tpu_custom_call.1} parent=1 // pred_region
      %14 = vsyncadd [#allocation3], 0
      %s15 = sshll.u32 %s0, 4
      %s16 = int_to_ptr.hbm [resolvable:$true] %s15
      %s17 = sshll.u32 [#allocation2], 4
      %s18 = int_to_ptr.vmem [resolvable:$true] %s17
      %23 = dma.hbm_to_vmem [thread:$0]  %s16, 16384, %s18, [#allocation3], 128, 128, 8
    $region5: #{tpu_custom_call.1} parent=1 // pred_fallthru
      _
    // Predicated region
    $region6: #{tpu_custom_call.1} parent=1 // pred_check
      _
    $region7: #{tpu_custom_call.1} parent=1 // pred_check_branch
      %25 = sbr.rel (0) target = $region9
    $region8: #{tpu_custom_call.1} parent=1 // pred_region
      %27 = vsyncadd [#allocation6], 0
      %s28 = sshll.u32 %s1, 4
      %s29 = int_to_ptr.hbm [resolvable:$true] %s28
      %s30 = sshll.u32 [#allocation5], 4
      %s31 = int_to_ptr.vmem [resolvable:$true] %s30
      %36 = dma.hbm_to_vmem [thread:$0]  %s29, 16384, %s31, [#allocation6], 128, 128, 8
    $region9: #{tpu_custom_call.1} parent=1 // pred_fallthru
      _
    // Predicated region
    $region10: #{tpu_custom_call.1} parent=1 // pred_check
      _
    $region11: #{tpu_custom_call.1} parent=1 // pred_check_branch
      %38 = sbr.rel (0) target = $region13
    $region12: #{tpu_custom_call.1} parent=1 // pred_region
      %40 = vsyncadd [#allocation6], 0
      %s41 = sshll.u32 %s2, 4
      %s42 = int_to_ptr.hbm [resolvable:$true] %s41
      %s43 = sshll.u32 [#allocation7], 4
      %s44 = int_to_ptr.vmem [resolvable:$true] %s43
      %49 = dma.hbm_to_vmem [thread:$0]  %s42, 16384, %s44, [#allocation6], 128, 128, 8
    $region13: #{tpu_custom_call.1} parent=1 // pred_fallthru
      _
    // Predicated region
    $region14: #{tpu_custom_call.1} parent=1 // pred_check
      _
    $region15: #{tpu_custom_call.1} parent=1 // pred_check_branch
      %51 = sbr.rel (0) target = $region17
    $region16: #{tpu_custom_call.1} parent=1 // pred_region
      %53 = dma.done [#allocation3], 16384
    $region17: #{tpu_custom_call.1} parent=1 // pred_fallthru
      _
    // Predicated region
    $region18: #{tpu_custom_call.1} parent=1 // pred_check
      _
    $region19: #{tpu_custom_call.1} parent=1 // pred_check_branch
      %55 = sbr.rel (0) target = $region21
    $region20: #{tpu_custom_call.1} parent=1 // pred_region
      %57 = dma.done [#allocation6], 16384
    $region21: #{tpu_custom_call.1} parent=1 // pred_fallthru
      _
    // Predicated region
    $region22: #{tpu_custom_call.1} parent=1 // pred_check
      _
    $region23: #{tpu_custom_call.1} parent=1 // pred_check_branch
      %59 = sbr.rel (0) target = $region25
    $region24: #{tpu_custom_call.1} parent=1 // pred_region
      %61 = dma.done [#allocation6], 16384
    $region25: #{tpu_custom_call.1} parent=1 // pred_fallthru
      _
    %v62 = vld [vmem:[#allocation2] sm:$0xff]
    %v63 = vld [vmem:[#allocation2 + $0x8] sm:$0xff]
    %v64 = vld [vmem:[#allocation2 + $0x10] sm:$0xff]
    %v65 = vld [vmem:[#allocation2 + $0x18] sm:$0xff]
    %v66 = vld [vmem:[#allocation2 + $0x20] sm:$0xff]
    %v67 = vld [vmem:[#allocation2 + $0x28] sm:$0xff]
    %v68 = vld [vmem:[#allocation2 + $0x30] sm:$0xff]
    %v69 = vld [vmem:[#allocation2 + $0x38] sm:$0xff]
    %v70 = vld [vmem:[#allocation2 + $0x40] sm:$0xff]
    %v71 = vld [vmem:[#allocation2 + $0x48] sm:$0xff]
    %v72 = vld [vmem:[#allocation2 + $0x50] sm:$0xff]
    %v73 = vld [vmem:[#allocation2 + $0x58] sm:$0xff]
    %v74 = vld [vmem:[#allocation2 + $0x60] sm:$0xff]
    %v75 = vld [vmem:[#allocation2 + $0x68] sm:$0xff]
    %v76 = vld [vmem:[#allocation2 + $0x70] sm:$0xff]
    %v77 = vld [vmem:[#allocation2 + $0x78] sm:$0xff]
    %v78 = vld [vmem:[#allocation2 + $0x80] sm:$0xff]
    %v79 = vld [vmem:[#allocation2 + $0x88] sm:$0xff]
    %v80 = vld [vmem:[#allocation2 + $0x90] sm:$0xff]
    %v81 = vld [vmem:[#allocation2 + $0x98] sm:$0xff]
    %v82 = vld [vmem:[#allocation2 + $0xa0] sm:$0xff]
    %v83 = vld [vmem:[#allocation2 + $0xa8] sm:$0xff]
    %v84 = vld [vmem:[#allocation2 + $0xb0] sm:$0xff]
    %v85 = vld [vmem:[#allocation2 + $0xb8] sm:$0xff]
    %v86 = vld [vmem:[#allocation2 + $0xc0] sm:$0xff]
    %v87 = vld [vmem:[#allocation2 + $0xc8] sm:$0xff]
    %v88 = vld [vmem:[#allocation2 + $0xd0] sm:$0xff]
    %v89 = vld [vmem:[#allocation2 + $0xd8] sm:$0xff]
    %v90 = vld [vmem:[#allocation2 + $0xe0] sm:$0xff]
    %v91 = vld [vmem:[#allocation2 + $0xe8] sm:$0xff]
    %v92 = vld [vmem:[#allocation2 + $0xf0] sm:$0xff]
    %v93 = vld [vmem:[#allocation2 + $0xf8] sm:$0xff]
    %v94 = vld [vmem:[#allocation2 + $0x100] sm:$0xff]
    %v95 = vld [vmem:[#allocation2 + $0x108] sm:$0xff]
    %v96 = vld [vmem:[#allocation2 + $0x110] sm:$0xff]
    %v97 = vld [vmem:[#allocation2 + $0x118] sm:$0xff]
    %v98 = vld [vmem:[#allocation2 + $0x120] sm:$0xff]
    %v99 = vld [vmem:[#allocation2 + $0x128] sm:$0xff]
    %v100 = vld [vmem:[#allocation2 + $0x130] sm:$0xff]
    %v101 = vld [vmem:[#allocation2 + $0x138] sm:$0xff]
    %v102 = vld [vmem:[#allocation2 + $0x140] sm:$0xff]
    %v103 = vld [vmem:[#allocation2 + $0x148] sm:$0xff]
    %v104 = vld [vmem:[#allocation2 + $0x150] sm:$0xff]
    %v105 = vld [vmem:[#allocation2 + $0x158] sm:$0xff]
    %v106 = vld [vmem:[#allocation2 + $0x160] sm:$0xff]
    %v107 = vld [vmem:[#allocation2 + $0x168] sm:$0xff]
    %v108 = vld [vmem:[#allocation2 + $0x170] sm:$0xff]
    %v109 = vld [vmem:[#allocation2 + $0x178] sm:$0xff]
    %v110 = vld [vmem:[#allocation2 + $0x180] sm:$0xff]
    %v111 = vld [vmem:[#allocation2 + $0x188] sm:$0xff]
    %v112 = vld [vmem:[#allocation2 + $0x190] sm:$0xff]
    %v113 = vld [vmem:[#allocation2 + $0x198] sm:$0xff]
    %v114 = vld [vmem:[#allocation2 + $0x1a0] sm:$0xff]
    %v115 = vld [vmem:[#allocation2 + $0x1a8] sm:$0xff]
    %v116 = vld [vmem:[#allocation2 + $0x1b0] sm:$0xff]
    %v117 = vld [vmem:[#allocation2 + $0x1b8] sm:$0xff]
    %v118 = vld [vmem:[#allocation2 + $0x1c0] sm:$0xff]
    %v119 = vld [vmem:[#allocation2 + $0x1c8] sm:$0xff]
    %v120 = vld [vmem:[#allocation2 + $0x1d0] sm:$0xff]
    %v121 = vld [vmem:[#allocation2 + $0x1d8] sm:$0xff]
    %v122 = vld [vmem:[#allocation2 + $0x1e0] sm:$0xff]
    %v123 = vld [vmem:[#allocation2 + $0x1e8] sm:$0xff]
    %v124 = vld [vmem:[#allocation2 + $0x1f0] sm:$0xff]
    %v125 = vld [vmem:[#allocation2 + $0x1f8] sm:$0xff]
    %v126 = vld [vmem:[#allocation2 + $0x200] sm:$0xff]
    %v127 = vld [vmem:[#allocation2 + $0x208] sm:$0xff]
    %v128 = vld [vmem:[#allocation2 + $0x210] sm:$0xff]
    %v129 = vld [vmem:[#allocation2 + $0x218] sm:$0xff]
    %v130 = vld [vmem:[#allocation2 + $0x220] sm:$0xff]
    %v131 = vld [vmem:[#allocation2 + $0x228] sm:$0xff]
    %v132 = vld [vmem:[#allocation2 + $0x230] sm:$0xff]
    %v133 = vld [vmem:[#allocation2 + $0x238] sm:$0xff]
    %v134 = vld [vmem:[#allocation2 + $0x240] sm:$0xff]
    %v135 = vld [vmem:[#allocation2 + $0x248] sm:$0xff]
    %v136 = vld [vmem:[#allocation2 + $0x250] sm:$0xff]
    %v137 = vld [vmem:[#allocation2 + $0x258] sm:$0xff]
    %v138 = vld [vmem:[#allocation2 + $0x260] sm:$0xff]
    %v139 = vld [vmem:[#allocation2 + $0x268] sm:$0xff]
    %v140 = vld [vmem:[#allocation2 + $0x270] sm:$0xff]
    %v141 = vld [vmem:[#allocation2 + $0x278] sm:$0xff]
    %v142 = vld [vmem:[#allocation2 + $0x280] sm:$0xff]
    %v143 = vld [vmem:[#allocation2 + $0x288] sm:$0xff]
    %v144 = vld [vmem:[#allocation2 + $0x290] sm:$0xff]
    %v145 = vld [vmem:[#allocation2 + $0x298] sm:$0xff]
    %v146 = vld [vmem:[#allocation2 + $0x2a0] sm:$0xff]
    %v147 = vld [vmem:[#allocation2 + $0x2a8] sm:$0xff]
    %v148 = vld [vmem:[#allocation2 + $0x2b0] sm:$0xff]
    %v149 = vld [vmem:[#allocation2 + $0x2b8] sm:$0xff]
    %v150 = vld [vmem:[#allocation2 + $0x2c0] sm:$0xff]
    %v151 = vld [vmem:[#allocation2 + $0x2c8] sm:$0xff]
    %v152 = vld [vmem:[#allocation2 + $0x2d0] sm:$0xff]
    %v153 = vld [vmem:[#allocation2 + $0x2d8] sm:$0xff]
    %v154 = vld [vmem:[#allocation2 + $0x2e0] sm:$0xff]
    %v155 = vld [vmem:[#allocation2 + $0x2e8] sm:$0xff]
    %v156 = vld [vmem:[#allocation2 + $0x2f0] sm:$0xff]
    %v157 = vld [vmem:[#allocation2 + $0x2f8] sm:$0xff]
    %v158 = vld [vmem:[#allocation2 + $0x300] sm:$0xff]
    %v159 = vld [vmem:[#allocation2 + $0x308] sm:$0xff]
    %v160 = vld [vmem:[#allocation2 + $0x310] sm:$0xff]
    %v161 = vld [vmem:[#allocation2 + $0x318] sm:$0xff]
    %v162 = vld [vmem:[#allocation2 + $0x320] sm:$0xff]
    %v163 = vld [vmem:[#allocation2 + $0x328] sm:$0xff]
    %v164 = vld [vmem:[#allocation2 + $0x330] sm:$0xff]
    %v165 = vld [vmem:[#allocation2 + $0x338] sm:$0xff]
    %v166 = vld [vmem:[#allocation2 + $0x340] sm:$0xff]
    %v167 = vld [vmem:[#allocation2 + $0x348] sm:$0xff]
    %v168 = vld [vmem:[#allocation2 + $0x350] sm:$0xff]
    %v169 = vld [vmem:[#allocation2 + $0x358] sm:$0xff]
    %v170 = vld [vmem:[#allocation2 + $0x360] sm:$0xff]
    %v171 = vld [vmem:[#allocation2 + $0x368] sm:$0xff]
    %v172 = vld [vmem:[#allocation2 + $0x370] sm:$0xff]
    %v173 = vld [vmem:[#allocation2 + $0x378] sm:$0xff]
    %v174 = vld [vmem:[#allocation2 + $0x380] sm:$0xff]
    %v175 = vld [vmem:[#allocation2 + $0x388] sm:$0xff]
    %v176 = vld [vmem:[#allocation2 + $0x390] sm:$0xff]
    %v177 = vld [vmem:[#allocation2 + $0x398] sm:$0xff]
    %v178 = vld [vmem:[#allocation2 + $0x3a0] sm:$0xff]
    %v179 = vld [vmem:[#allocation2 + $0x3a8] sm:$0xff]
    %v180 = vld [vmem:[#allocation2 + $0x3b0] sm:$0xff]
    %v181 = vld [vmem:[#allocation2 + $0x3b8] sm:$0xff]
    %v182 = vld [vmem:[#allocation2 + $0x3c0] sm:$0xff]
    %v183 = vld [vmem:[#allocation2 + $0x3c8] sm:$0xff]
    %v184 = vld [vmem:[#allocation2 + $0x3d0] sm:$0xff]
    %v185 = vld [vmem:[#allocation2 + $0x3d8] sm:$0xff]
    %v186 = vld [vmem:[#allocation2 + $0x3e0] sm:$0xff]
    %v187 = vld [vmem:[#allocation2 + $0x3e8] sm:$0xff]
    %v188 = vld [vmem:[#allocation2 + $0x3f0] sm:$0xff]
    %v189 = vld [vmem:[#allocation2 + $0x3f8] sm:$0xff]
    %v190 = vld [vmem:[#allocation5] sm:$0xff]
    %v191 = vld [vmem:[#allocation5 + $0x8] sm:$0xff]
    %v192 = vld [vmem:[#allocation5 + $0x10] sm:$0xff]
    %v193 = vld [vmem:[#allocation5 + $0x18] sm:$0xff]
    %v194 = vld [vmem:[#allocation5 + $0x20] sm:$0xff]
    %v195 = vld [vmem:[#allocation5 + $0x28] sm:$0xff]
    %v196 = vld [vmem:[#allocation5 + $0x30] sm:$0xff]
    %v197 = vld [vmem:[#allocation5 + $0x38] sm:$0xff]
    %v198 = vld [vmem:[#allocation5 + $0x40] sm:$0xff]
    %v199 = vld [vmem:[#allocation5 + $0x48] sm:$0xff]
    %v200 = vld [vmem:[#allocation5 + $0x50] sm:$0xff]
    %v201 = vld [vmem:[#allocation5 + $0x58] sm:$0xff]
    %v202 = vld [vmem:[#allocation5 + $0x60] sm:$0xff]
    %v203 = vld [vmem:[#allocation5 + $0x68] sm:$0xff]
    %v204 = vld [vmem:[#allocation5 + $0x70] sm:$0xff]
    %v205 = vld [vmem:[#allocation5 + $0x78] sm:$0xff]
    %v206 = vld [vmem:[#allocation5 + $0x80] sm:$0xff]
    %v207 = vld [vmem:[#allocation5 + $0x88] sm:$0xff]
    %v208 = vld [vmem:[#allocation5 + $0x90] sm:$0xff]
    %v209 = vld [vmem:[#allocation5 + $0x98] sm:$0xff]
    %v210 = vld [vmem:[#allocation5 + $0xa0] sm:$0xff]
    %v211 = vld [vmem:[#allocation5 + $0xa8] sm:$0xff]
    %v212 = vld [vmem:[#allocation5 + $0xb0] sm:$0xff]
    %v213 = vld [vmem:[#allocation5 + $0xb8] sm:$0xff]
    %v214 = vld [vmem:[#allocation5 + $0xc0] sm:$0xff]
    %v215 = vld [vmem:[#allocation5 + $0xc8] sm:$0xff]
    %v216 = vld [vmem:[#allocation5 + $0xd0] sm:$0xff]
    %v217 = vld [vmem:[#allocation5 + $0xd8] sm:$0xff]
    %v218 = vld [vmem:[#allocation5 + $0xe0] sm:$0xff]
    %v219 = vld [vmem:[#allocation5 + $0xe8] sm:$0xff]
    %v220 = vld [vmem:[#allocation5 + $0xf0] sm:$0xff]
    %v221 = vld [vmem:[#allocation5 + $0xf8] sm:$0xff]
    %v222 = vld [vmem:[#allocation5 + $0x100] sm:$0xff]
    %v223 = vld [vmem:[#allocation5 + $0x108] sm:$0xff]
    %v224 = vld [vmem:[#allocation5 + $0x110] sm:$0xff]
    %v225 = vld [vmem:[#allocation5 + $0x118] sm:$0xff]
    %v226 = vld [vmem:[#allocation5 + $0x120] sm:$0xff]
    %v227 = vld [vmem:[#allocation5 + $0x128] sm:$0xff]
    %v228 = vld [vmem:[#allocation5 + $0x130] sm:$0xff]
    %v229 = vld [vmem:[#allocation5 + $0x138] sm:$0xff]
    %v230 = vld [vmem:[#allocation5 + $0x140] sm:$0xff]
    %v231 = vld [vmem:[#allocation5 + $0x148] sm:$0xff]
    %v232 = vld [vmem:[#allocation5 + $0x150] sm:$0xff]
    %v233 = vld [vmem:[#allocation5 + $0x158] sm:$0xff]
    %v234 = vld [vmem:[#allocation5 + $0x160] sm:$0xff]
    %v235 = vld [vmem:[#allocation5 + $0x168] sm:$0xff]
    %v236 = vld [vmem:[#allocation5 + $0x170] sm:$0xff]
    %v237 = vld [vmem:[#allocation5 + $0x178] sm:$0xff]
    %v238 = vld [vmem:[#allocation5 + $0x180] sm:$0xff]
    %v239 = vld [vmem:[#allocation5 + $0x188] sm:$0xff]
    %v240 = vld [vmem:[#allocation5 + $0x190] sm:$0xff]
    %v241 = vld [vmem:[#allocation5 + $0x198] sm:$0xff]
    %v242 = vld [vmem:[#allocation5 + $0x1a0] sm:$0xff]
    %v243 = vld [vmem:[#allocation5 + $0x1a8] sm:$0xff]
    %v244 = vld [vmem:[#allocation5 + $0x1b0] sm:$0xff]
    %v245 = vld [vmem:[#allocation5 + $0x1b8] sm:$0xff]
    %v246 = vld [vmem:[#allocation5 + $0x1c0] sm:$0xff]
    %v247 = vld [vmem:[#allocation5 + $0x1c8] sm:$0xff]
    %v248 = vld [vmem:[#allocation5 + $0x1d0] sm:$0xff]
    %v249 = vld [vmem:[#allocation5 + $0x1d8] sm:$0xff]
    %v250 = vld [vmem:[#allocation5 + $0x1e0] sm:$0xff]
    %v251 = vld [vmem:[#allocation5 + $0x1e8] sm:$0xff]
    %v252 = vld [vmem:[#allocation5 + $0x1f0] sm:$0xff]
    %v253 = vld [vmem:[#allocation5 + $0x1f8] sm:$0xff]
    %v254 = vld [vmem:[#allocation5 + $0x200] sm:$0xff]
    %v255 = vld [vmem:[#allocation5 + $0x208] sm:$0xff]
    %v256 = vld [vmem:[#allocation5 + $0x210] sm:$0xff]
    %v257 = vld [vmem:[#allocation5 + $0x218] sm:$0xff]
    %v258 = vld [vmem:[#allocation5 + $0x220] sm:$0xff]
    %v259 = vld [vmem:[#allocation5 + $0x228] sm:$0xff]
    %v260 = vld [vmem:[#allocation5 + $0x230] sm:$0xff]
    %v261 = vld [vmem:[#allocation5 + $0x238] sm:$0xff]
    %v262 = vld [vmem:[#allocation5 + $0x240] sm:$0xff]
    %v263 = vld [vmem:[#allocation5 + $0x248] sm:$0xff]
    %v264 = vld [vmem:[#allocation5 + $0x250] sm:$0xff]
    %v265 = vld [vmem:[#allocation5 + $0x258] sm:$0xff]
    %v266 = vld [vmem:[#allocation5 + $0x260] sm:$0xff]
    %v267 = vld [vmem:[#allocation5 + $0x268] sm:$0xff]
    %v268 = vld [vmem:[#allocation5 + $0x270] sm:$0xff]
    %v269 = vld [vmem:[#allocation5 + $0x278] sm:$0xff]
    %v270 = vld [vmem:[#allocation5 + $0x280] sm:$0xff]
    %v271 = vld [vmem:[#allocation5 + $0x288] sm:$0xff]
    %v272 = vld [vmem:[#allocation5 + $0x290] sm:$0xff]
    %v273 = vld [vmem:[#allocation5 + $0x298] sm:$0xff]
    %v274 = vld [vmem:[#allocation5 + $0x2a0] sm:$0xff]
    %v275 = vld [vmem:[#allocation5 + $0x2a8] sm:$0xff]
    %v276 = vld [vmem:[#allocation5 + $0x2b0] sm:$0xff]
    %v277 = vld [vmem:[#allocation5 + $0x2b8] sm:$0xff]
    %v278 = vld [vmem:[#allocation5 + $0x2c0] sm:$0xff]
    %v279 = vld [vmem:[#allocation5 + $0x2c8] sm:$0xff]
    %v280 = vld [vmem:[#allocation5 + $0x2d0] sm:$0xff]
    %v281 = vld [vmem:[#allocation5 + $0x2d8] sm:$0xff]
    %v282 = vld [vmem:[#allocation5 + $0x2e0] sm:$0xff]
    %v283 = vld [vmem:[#allocation5 + $0x2e8] sm:$0xff]
    %v284 = vld [vmem:[#allocation5 + $0x2f0] sm:$0xff]
    %v285 = vld [vmem:[#allocation5 + $0x2f8] sm:$0xff]
    %v286 = vld [vmem:[#allocation5 + $0x300] sm:$0xff]
    %v287 = vld [vmem:[#allocation5 + $0x308] sm:$0xff]
    %v288 = vld [vmem:[#allocation5 + $0x310] sm:$0xff]
    %v289 = vld [vmem:[#allocation5 + $0x318] sm:$0xff]
    %v290 = vld [vmem:[#allocation5 + $0x320] sm:$0xff]
    %v291 = vld [vmem:[#allocation5 + $0x328] sm:$0xff]
    %v292 = vld [vmem:[#allocation5 + $0x330] sm:$0xff]
    %v293 = vld [vmem:[#allocation5 + $0x338] sm:$0xff]
    %v294 = vld [vmem:[#allocation5 + $0x340] sm:$0xff]
    %v295 = vld [vmem:[#allocation5 + $0x348] sm:$0xff]
    %v296 = vld [vmem:[#allocation5 + $0x350] sm:$0xff]
    %v297 = vld [vmem:[#allocation5 + $0x358] sm:$0xff]
    %v298 = vld [vmem:[#allocation5 + $0x360] sm:$0xff]
    %v299 = vld [vmem:[#allocation5 + $0x368] sm:$0xff]
    %v300 = vld [vmem:[#allocation5 + $0x370] sm:$0xff]
    %v301 = vld [vmem:[#allocation5 + $0x378] sm:$0xff]
    %v302 = vld [vmem:[#allocation5 + $0x380] sm:$0xff]
    %v303 = vld [vmem:[#allocation5 + $0x388] sm:$0xff]
    %v304 = vld [vmem:[#allocation5 + $0x390] sm:$0xff]
    %v305 = vld [vmem:[#allocation5 + $0x398] sm:$0xff]
    %v306 = vld [vmem:[#allocation5 + $0x3a0] sm:$0xff]
    %v307 = vld [vmem:[#allocation5 + $0x3a8] sm:$0xff]
    %v308 = vld [vmem:[#allocation5 + $0x3b0] sm:$0xff]
    %v309 = vld [vmem:[#allocation5 + $0x3b8] sm:$0xff]
    %v310 = vld [vmem:[#allocation5 + $0x3c0] sm:$0xff]
    %v311 = vld [vmem:[#allocation5 + $0x3c8] sm:$0xff]
    %v312 = vld [vmem:[#allocation5 + $0x3d0] sm:$0xff]
    %v313 = vld [vmem:[#allocation5 + $0x3d8] sm:$0xff]
    %v314 = vld [vmem:[#allocation5 + $0x3e0] sm:$0xff]
    %v315 = vld [vmem:[#allocation5 + $0x3e8] sm:$0xff]
    %v316 = vld [vmem:[#allocation5 + $0x3f0] sm:$0xff]
    %v317 = vld [vmem:[#allocation5 + $0x3f8] sm:$0xff]
    %v318 = vmax.f32 %v62, %v190
    %v319 = vmax.f32 %v63, %v191
    %v320 = vmax.f32 %v64, %v192
    %v321 = vmax.f32 %v65, %v193
    %v322 = vmax.f32 %v66, %v194
    %v323 = vmax.f32 %v67, %v195
    %v324 = vmax.f32 %v68, %v196
    %v325 = vmax.f32 %v69, %v197
    %v326 = vmax.f32 %v70, %v198
    %v327 = vmax.f32 %v71, %v199
    %v328 = vmax.f32 %v72, %v200
    %v329 = vmax.f32 %v73, %v201
    %v330 = vmax.f32 %v74, %v202
    %v331 = vmax.f32 %v75, %v203
    %v332 = vmax.f32 %v76, %v204
    %v333 = vmax.f32 %v77, %v205
    %v334 = vmax.f32 %v78, %v206
    %v335 = vmax.f32 %v79, %v207
    %v336 = vmax.f32 %v80, %v208
    %v337 = vmax.f32 %v81, %v209
    %v338 = vmax.f32 %v82, %v210
    %v339 = vmax.f32 %v83, %v211
    %v340 = vmax.f32 %v84, %v212
    %v341 = vmax.f32 %v85, %v213
    %v342 = vmax.f32 %v86, %v214
    %v343 = vmax.f32 %v87, %v215
    %v344 = vmax.f32 %v88, %v216
    %v345 = vmax.f32 %v89, %v217
    %v346 = vmax.f32 %v90, %v218
    %v347 = vmax.f32 %v91, %v219
    %v348 = vmax.f32 %v92, %v220
    %v349 = vmax.f32 %v93, %v221
    %v350 = vmax.f32 %v94, %v222
    %v351 = vmax.f32 %v95, %v223
    %v352 = vmax.f32 %v96, %v224
    %v353 = vmax.f32 %v97, %v225
    %v354 = vmax.f32 %v98, %v226
    %v355 = vmax.f32 %v99, %v227
    %v356 = vmax.f32 %v100, %v228
    %v357 = vmax.f32 %v101, %v229
    %v358 = vmax.f32 %v102, %v230
    %v359 = vmax.f32 %v103, %v231
    %v360 = vmax.f32 %v104, %v232
    %v361 = vmax.f32 %v105, %v233
    %v362 = vmax.f32 %v106, %v234
    %v363 = vmax.f32 %v107, %v235
    %v364 = vmax.f32 %v108, %v236
    %v365 = vmax.f32 %v109, %v237
    %v366 = vmax.f32 %v110, %v238
    %v367 = vmax.f32 %v111, %v239
    %v368 = vmax.f32 %v112, %v240
    %v369 = vmax.f32 %v113, %v241
    %v370 = vmax.f32 %v114, %v242
    %v371 = vmax.f32 %v115, %v243
    %v372 = vmax.f32 %v116, %v244
    %v373 = vmax.f32 %v117, %v245
    %v374 = vmax.f32 %v118, %v246
    %v375 = vmax.f32 %v119, %v247
    %v376 = vmax.f32 %v120, %v248
    %v377 = vmax.f32 %v121, %v249
    %v378 = vmax.f32 %v122, %v250
    %v379 = vmax.f32 %v123, %v251
    %v380 = vmax.f32 %v124, %v252
    %v381 = vmax.f32 %v125, %v253
    %v382 = vmax.f32 %v126, %v254
    %v383 = vmax.f32 %v127, %v255
    %v384 = vmax.f32 %v128, %v256
    %v385 = vmax.f32 %v129, %v257
    %v386 = vmax.f32 %v130, %v258
    %v387 = vmax.f32 %v131, %v259
    %v388 = vmax.f32 %v132, %v260
    %v389 = vmax.f32 %v133, %v261
    %v390 = vmax.f32 %v134, %v262
    %v391 = vmax.f32 %v135, %v263
    %v392 = vmax.f32 %v136, %v264
    %v393 = vmax.f32 %v137, %v265
    %v394 = vmax.f32 %v138, %v266
    %v395 = vmax.f32 %v139, %v267
    %v396 = vmax.f32 %v140, %v268
    %v397 = vmax.f32 %v141, %v269
    %v398 = vmax.f32 %v142, %v270
    %v399 = vmax.f32 %v143, %v271
    %v400 = vmax.f32 %v144, %v272
    %v401 = vmax.f32 %v145, %v273
    %v402 = vmax.f32 %v146, %v274
    %v403 = vmax.f32 %v147, %v275
    %v404 = vmax.f32 %v148, %v276
    %v405 = vmax.f32 %v149, %v277
    %v406 = vmax.f32 %v150, %v278
    %v407 = vmax.f32 %v151, %v279
    %v408 = vmax.f32 %v152, %v280
    %v409 = vmax.f32 %v153, %v281
    %v410 = vmax.f32 %v154, %v282
    %v411 = vmax.f32 %v155, %v283
    %v412 = vmax.f32 %v156, %v284
    %v413 = vmax.f32 %v157, %v285
    %v414 = vmax.f32 %v158, %v286
    %v415 = vmax.f32 %v159, %v287
    %v416 = vmax.f32 %v160, %v288
    %v417 = vmax.f32 %v161, %v289
    %v418 = vmax.f32 %v162, %v290
    %v419 = vmax.f32 %v163, %v291
    %v420 = vmax.f32 %v164, %v292
    %v421 = vmax.f32 %v165, %v293
    %v422 = vmax.f32 %v166, %v294
    %v423 = vmax.f32 %v167, %v295
    %v424 = vmax.f32 %v168, %v296
    %v425 = vmax.f32 %v169, %v297
    %v426 = vmax.f32 %v170, %v298
    %v427 = vmax.f32 %v171, %v299
    %v428 = vmax.f32 %v172, %v300
    %v429 = vmax.f32 %v173, %v301
    %v430 = vmax.f32 %v174, %v302
    %v431 = vmax.f32 %v175, %v303
    %v432 = vmax.f32 %v176, %v304
    %v433 = vmax.f32 %v177, %v305
    %v434 = vmax.f32 %v178, %v306
    %v435 = vmax.f32 %v179, %v307
    %v436 = vmax.f32 %v180, %v308
    %v437 = vmax.f32 %v181, %v309
    %v438 = vmax.f32 %v182, %v310
    %v439 = vmax.f32 %v183, %v311
    %v440 = vmax.f32 %v184, %v312
    %v441 = vmax.f32 %v185, %v313
    %v442 = vmax.f32 %v186, %v314
    %v443 = vmax.f32 %v187, %v315
    %v444 = vmax.f32 %v188, %v316
    %v445 = vmax.f32 %v189, %v317
    %v446 = vld [vmem:[#allocation7] sm:$0xff]
    %v447 = vld [vmem:[#allocation7 + $0x8] sm:$0xff]
    %v448 = vld [vmem:[#allocation7 + $0x10] sm:$0xff]
    %v449 = vld [vmem:[#allocation7 + $0x18] sm:$0xff]
    %v450 = vld [vmem:[#allocation7 + $0x20] sm:$0xff]
    %v451 = vld [vmem:[#allocation7 + $0x28] sm:$0xff]
    %v452 = vld [vmem:[#allocation7 + $0x30] sm:$0xff]
    %v453 = vld [vmem:[#allocation7 + $0x38] sm:$0xff]
    %v454 = vld [vmem:[#allocation7 + $0x40] sm:$0xff]
    %v455 = vld [vmem:[#allocation7 + $0x48] sm:$0xff]
    %v456 = vld [vmem:[#allocation7 + $0x50] sm:$0xff]
    %v457 = vld [vmem:[#allocation7 + $0x58] sm:$0xff]
    %v458 = vld [vmem:[#allocation7 + $0x60] sm:$0xff]
    %v459 = vld [vmem:[#allocation7 + $0x68] sm:$0xff]
    %v460 = vld [vmem:[#allocation7 + $0x70] sm:$0xff]
    %v461 = vld [vmem:[#allocation7 + $0x78] sm:$0xff]
    %v462 = vld [vmem:[#allocation7 + $0x80] sm:$0xff]
    %v463 = vld [vmem:[#allocation7 + $0x88] sm:$0xff]
    %v464 = vld [vmem:[#allocation7 + $0x90] sm:$0xff]
    %v465 = vld [vmem:[#allocation7 + $0x98] sm:$0xff]
    %v466 = vld [vmem:[#allocation7 + $0xa0] sm:$0xff]
    %v467 = vld [vmem:[#allocation7 + $0xa8] sm:$0xff]
    %v468 = vld [vmem:[#allocation7 + $0xb0] sm:$0xff]
    %v469 = vld [vmem:[#allocation7 + $0xb8] sm:$0xff]
    %v470 = vld [vmem:[#allocation7 + $0xc0] sm:$0xff]
    %v471 = vld [vmem:[#allocation7 + $0xc8] sm:$0xff]
    %v472 = vld [vmem:[#allocation7 + $0xd0] sm:$0xff]
    %v473 = vld [vmem:[#allocation7 + $0xd8] sm:$0xff]
    %v474 = vld [vmem:[#allocation7 + $0xe0] sm:$0xff]
    %v475 = vld [vmem:[#allocation7 + $0xe8] sm:$0xff]
    %v476 = vld [vmem:[#allocation7 + $0xf0] sm:$0xff]
    %v477 = vld [vmem:[#allocation7 + $0xf8] sm:$0xff]
    %v478 = vld [vmem:[#allocation7 + $0x100] sm:$0xff]
    %v479 = vld [vmem:[#allocation7 + $0x108] sm:$0xff]
    %v480 = vld [vmem:[#allocation7 + $0x110] sm:$0xff]
    %v481 = vld [vmem:[#allocation7 + $0x118] sm:$0xff]
    %v482 = vld [vmem:[#allocation7 + $0x120] sm:$0xff]
    %v483 = vld [vmem:[#allocation7 + $0x128] sm:$0xff]
    %v484 = vld [vmem:[#allocation7 + $0x130] sm:$0xff]
    %v485 = vld [vmem:[#allocation7 + $0x138] sm:$0xff]
    %v486 = vld [vmem:[#allocation7 + $0x140] sm:$0xff]
    %v487 = vld [vmem:[#allocation7 + $0x148] sm:$0xff]
    %v488 = vld [vmem:[#allocation7 + $0x150] sm:$0xff]
    %v489 = vld [vmem:[#allocation7 + $0x158] sm:$0xff]
    %v490 = vld [vmem:[#allocation7 + $0x160] sm:$0xff]
    %v491 = vld [vmem:[#allocation7 + $0x168] sm:$0xff]
    %v492 = vld [vmem:[#allocation7 + $0x170] sm:$0xff]
    %v493 = vld [vmem:[#allocation7 + $0x178] sm:$0xff]
    %v494 = vld [vmem:[#allocation7 + $0x180] sm:$0xff]
    %v495 = vld [vmem:[#allocation7 + $0x188] sm:$0xff]
    %v496 = vld [vmem:[#allocation7 + $0x190] sm:$0xff]
    %v497 = vld [vmem:[#allocation7 + $0x198] sm:$0xff]
    %v498 = vld [vmem:[#allocation7 + $0x1a0] sm:$0xff]
    %v499 = vld [vmem:[#allocation7 + $0x1a8] sm:$0xff]
    %v500 = vld [vmem:[#allocation7 + $0x1b0] sm:$0xff]
    %v501 = vld [vmem:[#allocation7 + $0x1b8] sm:$0xff]
    %v502 = vld [vmem:[#allocation7 + $0x1c0] sm:$0xff]
    %v503 = vld [vmem:[#allocation7 + $0x1c8] sm:$0xff]
    %v504 = vld [vmem:[#allocation7 + $0x1d0] sm:$0xff]
    %v505 = vld [vmem:[#allocation7 + $0x1d8] sm:$0xff]
    %v506 = vld [vmem:[#allocation7 + $0x1e0] sm:$0xff]
    %v507 = vld [vmem:[#allocation7 + $0x1e8] sm:$0xff]
    %v508 = vld [vmem:[#allocation7 + $0x1f0] sm:$0xff]
    %v509 = vld [vmem:[#allocation7 + $0x1f8] sm:$0xff]
    %v510 = vld [vmem:[#allocation7 + $0x200] sm:$0xff]
    %v511 = vld [vmem:[#allocation7 + $0x208] sm:$0xff]
    %v512 = vld [vmem:[#allocation7 + $0x210] sm:$0xff]
    %v513 = vld [vmem:[#allocation7 + $0x218] sm:$0xff]
    %v514 = vld [vmem:[#allocation7 + $0x220] sm:$0xff]
    %v515 = vld [vmem:[#allocation7 + $0x228] sm:$0xff]
    %v516 = vld [vmem:[#allocation7 + $0x230] sm:$0xff]
    %v517 = vld [vmem:[#allocation7 + $0x238] sm:$0xff]
    %v518 = vld [vmem:[#allocation7 + $0x240] sm:$0xff]
    %v519 = vld [vmem:[#allocation7 + $0x248] sm:$0xff]
    %v520 = vld [vmem:[#allocation7 + $0x250] sm:$0xff]
    %v521 = vld [vmem:[#allocation7 + $0x258] sm:$0xff]
    %v522 = vld [vmem:[#allocation7 + $0x260] sm:$0xff]
    %v523 = vld [vmem:[#allocation7 + $0x268] sm:$0xff]
    %v524 = vld [vmem:[#allocation7 + $0x270] sm:$0xff]
    %v525 = vld [vmem:[#allocation7 + $0x278] sm:$0xff]
    %v526 = vld [vmem:[#allocation7 + $0x280] sm:$0xff]
    %v527 = vld [vmem:[#allocation7 + $0x288] sm:$0xff]
    %v528 = vld [vmem:[#allocation7 + $0x290] sm:$0xff]
    %v529 = vld [vmem:[#allocation7 + $0x298] sm:$0xff]
    %v530 = vld [vmem:[#allocation7 + $0x2a0] sm:$0xff]
    %v531 = vld [vmem:[#allocation7 + $0x2a8] sm:$0xff]
    %v532 = vld [vmem:[#allocation7 + $0x2b0] sm:$0xff]
    %v533 = vld [vmem:[#allocation7 + $0x2b8] sm:$0xff]
    %v534 = vld [vmem:[#allocation7 + $0x2c0] sm:$0xff]
    %v535 = vld [vmem:[#allocation7 + $0x2c8] sm:$0xff]
    %v536 = vld [vmem:[#allocation7 + $0x2d0] sm:$0xff]
    %v537 = vld [vmem:[#allocation7 + $0x2d8] sm:$0xff]
    %v538 = vld [vmem:[#allocation7 + $0x2e0] sm:$0xff]
    %v539 = vld [vmem:[#allocation7 + $0x2e8] sm:$0xff]
    %v540 = vld [vmem:[#allocation7 + $0x2f0] sm:$0xff]
    %v541 = vld [vmem:[#allocation7 + $0x2f8] sm:$0xff]
    %v542 = vld [vmem:[#allocation7 + $0x300] sm:$0xff]
    %v543 = vld [vmem:[#allocation7 + $0x308] sm:$0xff]
    %v544 = vld [vmem:[#allocation7 + $0x310] sm:$0xff]
    %v545 = vld [vmem:[#allocation7 + $0x318] sm:$0xff]
    %v546 = vld [vmem:[#allocation7 + $0x320] sm:$0xff]
    %v547 = vld [vmem:[#allocation7 + $0x328] sm:$0xff]
    %v548 = vld [vmem:[#allocation7 + $0x330] sm:$0xff]
    %v549 = vld [vmem:[#allocation7 + $0x338] sm:$0xff]
    %v550 = vld [vmem:[#allocation7 + $0x340] sm:$0xff]
    %v551 = vld [vmem:[#allocation7 + $0x348] sm:$0xff]
    %v552 = vld [vmem:[#allocation7 + $0x350] sm:$0xff]
    %v553 = vld [vmem:[#allocation7 + $0x358] sm:$0xff]
    %v554 = vld [vmem:[#allocation7 + $0x360] sm:$0xff]
    %v555 = vld [vmem:[#allocation7 + $0x368] sm:$0xff]
    %v556 = vld [vmem:[#allocation7 + $0x370] sm:$0xff]
    %v557 = vld [vmem:[#allocation7 + $0x378] sm:$0xff]
    %v558 = vld [vmem:[#allocation7 + $0x380] sm:$0xff]
    %v559 = vld [vmem:[#allocation7 + $0x388] sm:$0xff]
    %v560 = vld [vmem:[#allocation7 + $0x390] sm:$0xff]
    %v561 = vld [vmem:[#allocation7 + $0x398] sm:$0xff]
    %v562 = vld [vmem:[#allocation7 + $0x3a0] sm:$0xff]
    %v563 = vld [vmem:[#allocation7 + $0x3a8] sm:$0xff]
    %v564 = vld [vmem:[#allocation7 + $0x3b0] sm:$0xff]
    %v565 = vld [vmem:[#allocation7 + $0x3b8] sm:$0xff]
    %v566 = vld [vmem:[#allocation7 + $0x3c0] sm:$0xff]
    %v567 = vld [vmem:[#allocation7 + $0x3c8] sm:$0xff]
    %v568 = vld [vmem:[#allocation7 + $0x3d0] sm:$0xff]
    %v569 = vld [vmem:[#allocation7 + $0x3d8] sm:$0xff]
    %v570 = vld [vmem:[#allocation7 + $0x3e0] sm:$0xff]
    %v571 = vld [vmem:[#allocation7 + $0x3e8] sm:$0xff]
    %v572 = vld [vmem:[#allocation7 + $0x3f0] sm:$0xff]
    %v573 = vld [vmem:[#allocation7 + $0x3f8] sm:$0xff]
    %v574 = vmax.f32 %v318, %v446
    %v575 = vmax.f32 %v319, %v447
    %v576 = vmax.f32 %v320, %v448
    %v577 = vmax.f32 %v321, %v449
    %v578 = vmax.f32 %v322, %v450
    %v579 = vmax.f32 %v323, %v451
    %v580 = vmax.f32 %v324, %v452
    %v581 = vmax.f32 %v325, %v453
    %v582 = vmax.f32 %v326, %v454
    %v583 = vmax.f32 %v327, %v455
    %v584 = vmax.f32 %v328, %v456
    %v585 = vmax.f32 %v329, %v457
    %v586 = vmax.f32 %v330, %v458
    %v587 = vmax.f32 %v331, %v459
    %v588 = vmax.f32 %v332, %v460
    %v589 = vmax.f32 %v333, %v461
    %v590 = vmax.f32 %v334, %v462
    %v591 = vmax.f32 %v335, %v463
    %v592 = vmax.f32 %v336, %v464
    %v593 = vmax.f32 %v337, %v465
    %v594 = vmax.f32 %v338, %v466
    %v595 = vmax.f32 %v339, %v467
    %v596 = vmax.f32 %v340, %v468
    %v597 = vmax.f32 %v341, %v469
    %v598 = vmax.f32 %v342, %v470
    %v599 = vmax.f32 %v343, %v471
    %v600 = vmax.f32 %v344, %v472
    %v601 = vmax.f32 %v345, %v473
    %v602 = vmax.f32 %v346, %v474
    %v603 = vmax.f32 %v347, %v475
    %v604 = vmax.f32 %v348, %v476
    %v605 = vmax.f32 %v349, %v477
    %v606 = vmax.f32 %v350, %v478
    %v607 = vmax.f32 %v351, %v479
    %v608 = vmax.f32 %v352, %v480
    %v609 = vmax.f32 %v353, %v481
    %v610 = vmax.f32 %v354, %v482
    %v611 = vmax.f32 %v355, %v483
    %v612 = vmax.f32 %v356, %v484
    %v613 = vmax.f32 %v357, %v485
    %v614 = vmax.f32 %v358, %v486
    %v615 = vmax.f32 %v359, %v487
    %v616 = vmax.f32 %v360, %v488
    %v617 = vmax.f32 %v361, %v489
    %v618 = vmax.f32 %v362, %v490
    %v619 = vmax.f32 %v363, %v491
    %v620 = vmax.f32 %v364, %v492
    %v621 = vmax.f32 %v365, %v493
    %v622 = vmax.f32 %v366, %v494
    %v623 = vmax.f32 %v367, %v495
    %v624 = vmax.f32 %v368, %v496
    %v625 = vmax.f32 %v369, %v497
    %v626 = vmax.f32 %v370, %v498
    %v627 = vmax.f32 %v371, %v499
    %v628 = vmax.f32 %v372, %v500
    %v629 = vmax.f32 %v373, %v501
    %v630 = vmax.f32 %v374, %v502
    %v631 = vmax.f32 %v375, %v503
    %v632 = vmax.f32 %v376, %v504
    %v633 = vmax.f32 %v377, %v505
    %v634 = vmax.f32 %v378, %v506
    %v635 = vmax.f32 %v379, %v507
    %v636 = vmax.f32 %v380, %v508
    %v637 = vmax.f32 %v381, %v509
    %v638 = vmax.f32 %v382, %v510
    %v639 = vmax.f32 %v383, %v511
    %v640 = vmax.f32 %v384, %v512
    %v641 = vmax.f32 %v385, %v513
    %v642 = vmax.f32 %v386, %v514
    %v643 = vmax.f32 %v387, %v515
    %v644 = vmax.f32 %v388, %v516
    %v645 = vmax.f32 %v389, %v517
    %v646 = vmax.f32 %v390, %v518
    %v647 = vmax.f32 %v391, %v519
    %v648 = vmax.f32 %v392, %v520
    %v649 = vmax.f32 %v393, %v521
    %v650 = vmax.f32 %v394, %v522
    %v651 = vmax.f32 %v395, %v523
    %v652 = vmax.f32 %v396, %v524
    %v653 = vmax.f32 %v397, %v525
    %v654 = vmax.f32 %v398, %v526
    %v655 = vmax.f32 %v399, %v527
    %v656 = vmax.f32 %v400, %v528
    %v657 = vmax.f32 %v401, %v529
    %v658 = vmax.f32 %v402, %v530
    %v659 = vmax.f32 %v403, %v531
    %v660 = vmax.f32 %v404, %v532
    %v661 = vmax.f32 %v405, %v533
    %v662 = vmax.f32 %v406, %v534
    %v663 = vmax.f32 %v407, %v535
    %v664 = vmax.f32 %v408, %v536
    %v665 = vmax.f32 %v409, %v537
    %v666 = vmax.f32 %v410, %v538
    %v667 = vmax.f32 %v411, %v539
    %v668 = vmax.f32 %v412, %v540
    %v669 = vmax.f32 %v413, %v541
    %v670 = vmax.f32 %v414, %v542
    %v671 = vmax.f32 %v415, %v543
    %v672 = vmax.f32 %v416, %v544
    %v673 = vmax.f32 %v417, %v545
    %v674 = vmax.f32 %v418, %v546
    %v675 = vmax.f32 %v419, %v547
    %v676 = vmax.f32 %v420, %v548
    %v677 = vmax.f32 %v421, %v549
    %v678 = vmax.f32 %v422, %v550
    %v679 = vmax.f32 %v423, %v551
    %v680 = vmax.f32 %v424, %v552
    %v681 = vmax.f32 %v425, %v553
    %v682 = vmax.f32 %v426, %v554
    %v683 = vmax.f32 %v427, %v555
    %v684 = vmax.f32 %v428, %v556
    %v685 = vmax.f32 %v429, %v557
    %v686 = vmax.f32 %v430, %v558
    %v687 = vmax.f32 %v431, %v559
    %v688 = vmax.f32 %v432, %v560
    %v689 = vmax.f32 %v433, %v561
    %v690 = vmax.f32 %v434, %v562
    %v691 = vmax.f32 %v435, %v563
    %v692 = vmax.f32 %v436, %v564
    %v693 = vmax.f32 %v437, %v565
    %v694 = vmax.f32 %v438, %v566
    %v695 = vmax.f32 %v439, %v567
    %v696 = vmax.f32 %v440, %v568
    %v697 = vmax.f32 %v441, %v569
    %v698 = vmax.f32 %v442, %v570
    %v699 = vmax.f32 %v443, %v571
    %v700 = vmax.f32 %v444, %v572
    %v701 = vmax.f32 %v445, %v573
    %702 = vst [vmem:[#allocation8] sm:$0xff] %v574
    %703 = vst [vmem:[#allocation8 + $0x8] sm:$0xff] %v575
    %704 = vst [vmem:[#allocation8 + $0x10] sm:$0xff] %v576
    %705 = vst [vmem:[#allocation8 + $0x18] sm:$0xff] %v577
    %706 = vst [vmem:[#allocation8 + $0x20] sm:$0xff] %v578
    %707 = vst [vmem:[#allocation8 + $0x28] sm:$0xff] %v579
    %708 = vst [vmem:[#allocation8 + $0x30] sm:$0xff] %v580
    %709 = vst [vmem:[#allocation8 + $0x38] sm:$0xff] %v581
    %710 = vst [vmem:[#allocation8 + $0x40] sm:$0xff] %v582
    %711 = vst [vmem:[#allocation8 + $0x48] sm:$0xff] %v583
    %712 = vst [vmem:[#allocation8 + $0x50] sm:$0xff] %v584
    %713 = vst [vmem:[#allocation8 + $0x58] sm:$0xff] %v585
    %714 = vst [vmem:[#allocation8 + $0x60] sm:$0xff] %v586
    %715 = vst [vmem:[#allocation8 + $0x68] sm:$0xff] %v587
    %716 = vst [vmem:[#allocation8 + $0x70] sm:$0xff] %v588
    %717 = vst [vmem:[#allocation8 + $0x78] sm:$0xff] %v589
    %718 = vst [vmem:[#allocation8 + $0x80] sm:$0xff] %v590
    %719 = vst [vmem:[#allocation8 + $0x88] sm:$0xff] %v591
    %720 = vst [vmem:[#allocation8 + $0x90] sm:$0xff] %v592
    %721 = vst [vmem:[#allocation8 + $0x98] sm:$0xff] %v593
    %722 = vst [vmem:[#allocation8 + $0xa0] sm:$0xff] %v594
    %723 = vst [vmem:[#allocation8 + $0xa8] sm:$0xff] %v595
    %724 = vst [vmem:[#allocation8 + $0xb0] sm:$0xff] %v596
    %725 = vst [vmem:[#allocation8 + $0xb8] sm:$0xff] %v597
    %726 = vst [vmem:[#allocation8 + $0xc0] sm:$0xff] %v598
    %727 = vst [vmem:[#allocation8 + $0xc8] sm:$0xff] %v599
    %728 = vst [vmem:[#allocation8 + $0xd0] sm:$0xff] %v600
    %729 = vst [vmem:[#allocation8 + $0xd8] sm:$0xff] %v601
    %730 = vst [vmem:[#allocation8 + $0xe0] sm:$0xff] %v602
    %731 = vst [vmem:[#allocation8 + $0xe8] sm:$0xff] %v603
    %732 = vst [vmem:[#allocation8 + $0xf0] sm:$0xff] %v604
    %733 = vst [vmem:[#allocation8 + $0xf8] sm:$0xff] %v605
    %734 = vst [vmem:[#allocation8 + $0x100] sm:$0xff] %v606
    %735 = vst [vmem:[#allocation8 + $0x108] sm:$0xff] %v607
    %736 = vst [vmem:[#allocation8 + $0x110] sm:$0xff] %v608
    %737 = vst [vmem:[#allocation8 + $0x118] sm:$0xff] %v609
    %738 = vst [vmem:[#allocation8 + $0x120] sm:$0xff] %v610
    %739 = vst [vmem:[#allocation8 + $0x128] sm:$0xff] %v611
    %740 = vst [vmem:[#allocation8 + $0x130] sm:$0xff] %v612
    %741 = vst [vmem:[#allocation8 + $0x138] sm:$0xff] %v613
    %742 = vst [vmem:[#allocation8 + $0x140] sm:$0xff] %v614
    %743 = vst [vmem:[#allocation8 + $0x148] sm:$0xff] %v615
    %744 = vst [vmem:[#allocation8 + $0x150] sm:$0xff] %v616
    %745 = vst [vmem:[#allocation8 + $0x158] sm:$0xff] %v617
    %746 = vst [vmem:[#allocation8 + $0x160] sm:$0xff] %v618
    %747 = vst [vmem:[#allocation8 + $0x168] sm:$0xff] %v619
    %748 = vst [vmem:[#allocation8 + $0x170] sm:$0xff] %v620
    %749 = vst [vmem:[#allocation8 + $0x178] sm:$0xff] %v621
    %750 = vst [vmem:[#allocation8 + $0x180] sm:$0xff] %v622
    %751 = vst [vmem:[#allocation8 + $0x188] sm:$0xff] %v623
    %752 = vst [vmem:[#allocation8 + $0x190] sm:$0xff] %v624
    %753 = vst [vmem:[#allocation8 + $0x198] sm:$0xff] %v625
    %754 = vst [vmem:[#allocation8 + $0x1a0] sm:$0xff] %v626
    %755 = vst [vmem:[#allocation8 + $0x1a8] sm:$0xff] %v627
    %756 = vst [vmem:[#allocation8 + $0x1b0] sm:$0xff] %v628
    %757 = vst [vmem:[#allocation8 + $0x1b8] sm:$0xff] %v629
    %758 = vst [vmem:[#allocation8 + $0x1c0] sm:$0xff] %v630
    %759 = vst [vmem:[#allocation8 + $0x1c8] sm:$0xff] %v631
    %760 = vst [vmem:[#allocation8 + $0x1d0] sm:$0xff] %v632
    %761 = vst [vmem:[#allocation8 + $0x1d8] sm:$0xff] %v633
    %762 = vst [vmem:[#allocation8 + $0x1e0] sm:$0xff] %v634
    %763 = vst [vmem:[#allocation8 + $0x1e8] sm:$0xff] %v635
    %764 = vst [vmem:[#allocation8 + $0x1f0] sm:$0xff] %v636
    %765 = vst [vmem:[#allocation8 + $0x1f8] sm:$0xff] %v637
    %766 = vst [vmem:[#allocation8 + $0x200] sm:$0xff] %v638
    %767 = vst [vmem:[#allocation8 + $0x208] sm:$0xff] %v639
    %768 = vst [vmem:[#allocation8 + $0x210] sm:$0xff] %v640
    %769 = vst [vmem:[#allocation8 + $0x218] sm:$0xff] %v641
    %770 = vst [vmem:[#allocation8 + $0x220] sm:$0xff] %v642
    %771 = vst [vmem:[#allocation8 + $0x228] sm:$0xff] %v643
    %772 = vst [vmem:[#allocation8 + $0x230] sm:$0xff] %v644
    %773 = vst [vmem:[#allocation8 + $0x238] sm:$0xff] %v645
    %774 = vst [vmem:[#allocation8 + $0x240] sm:$0xff] %v646
    %775 = vst [vmem:[#allocation8 + $0x248] sm:$0xff] %v647
    %776 = vst [vmem:[#allocation8 + $0x250] sm:$0xff] %v648
    %777 = vst [vmem:[#allocation8 + $0x258] sm:$0xff] %v649
    %778 = vst [vmem:[#allocation8 + $0x260] sm:$0xff] %v650
    %779 = vst [vmem:[#allocation8 + $0x268] sm:$0xff] %v651
    %780 = vst [vmem:[#allocation8 + $0x270] sm:$0xff] %v652
    %781 = vst [vmem:[#allocation8 + $0x278] sm:$0xff] %v653
    %782 = vst [vmem:[#allocation8 + $0x280] sm:$0xff] %v654
    %783 = vst [vmem:[#allocation8 + $0x288] sm:$0xff] %v655
    %784 = vst [vmem:[#allocation8 + $0x290] sm:$0xff] %v656
    %785 = vst [vmem:[#allocation8 + $0x298] sm:$0xff] %v657
    %786 = vst [vmem:[#allocation8 + $0x2a0] sm:$0xff] %v658
    %787 = vst [vmem:[#allocation8 + $0x2a8] sm:$0xff] %v659
    %788 = vst [vmem:[#allocation8 + $0x2b0] sm:$0xff] %v660
    %789 = vst [vmem:[#allocation8 + $0x2b8] sm:$0xff] %v661
    %790 = vst [vmem:[#allocation8 + $0x2c0] sm:$0xff] %v662
    %791 = vst [vmem:[#allocation8 + $0x2c8] sm:$0xff] %v663
    %792 = vst [vmem:[#allocation8 + $0x2d0] sm:$0xff] %v664
    %793 = vst [vmem:[#allocation8 + $0x2d8] sm:$0xff] %v665
    %794 = vst [vmem:[#allocation8 + $0x2e0] sm:$0xff] %v666
    %795 = vst [vmem:[#allocation8 + $0x2e8] sm:$0xff] %v667
    %796 = vst [vmem:[#allocation8 + $0x2f0] sm:$0xff] %v668
    %797 = vst [vmem:[#allocation8 + $0x2f8] sm:$0xff] %v669
    %798 = vst [vmem:[#allocation8 + $0x300] sm:$0xff] %v670
    %799 = vst [vmem:[#allocation8 + $0x308] sm:$0xff] %v671
    %800 = vst [vmem:[#allocation8 + $0x310] sm:$0xff] %v672
    %801 = vst [vmem:[#allocation8 + $0x318] sm:$0xff] %v673
    %802 = vst [vmem:[#allocation8 + $0x320] sm:$0xff] %v674
    %803 = vst [vmem:[#allocation8 + $0x328] sm:$0xff] %v675
    %804 = vst [vmem:[#allocation8 + $0x330] sm:$0xff] %v676
    %805 = vst [vmem:[#allocation8 + $0x338] sm:$0xff] %v677
    %806 = vst [vmem:[#allocation8 + $0x340] sm:$0xff] %v678
    %807 = vst [vmem:[#allocation8 + $0x348] sm:$0xff] %v679
    %808 = vst [vmem:[#allocation8 + $0x350] sm:$0xff] %v680
    %809 = vst [vmem:[#allocation8 + $0x358] sm:$0xff] %v681
    %810 = vst [vmem:[#allocation8 + $0x360] sm:$0xff] %v682
    %811 = vst [vmem:[#allocation8 + $0x368] sm:$0xff] %v683
    %812 = vst [vmem:[#allocation8 + $0x370] sm:$0xff] %v684
    %813 = vst [vmem:[#allocation8 + $0x378] sm:$0xff] %v685
    %814 = vst [vmem:[#allocation8 + $0x380] sm:$0xff] %v686
    %815 = vst [vmem:[#allocation8 + $0x388] sm:$0xff] %v687
    %816 = vst [vmem:[#allocation8 + $0x390] sm:$0xff] %v688
    %817 = vst [vmem:[#allocation8 + $0x398] sm:$0xff] %v689
    %818 = vst [vmem:[#allocation8 + $0x3a0] sm:$0xff] %v690
    %819 = vst [vmem:[#allocation8 + $0x3a8] sm:$0xff] %v691
    %820 = vst [vmem:[#allocation8 + $0x3b0] sm:$0xff] %v692
    %821 = vst [vmem:[#allocation8 + $0x3b8] sm:$0xff] %v693
    %822 = vst [vmem:[#allocation8 + $0x3c0] sm:$0xff] %v694
    %823 = vst [vmem:[#allocation8 + $0x3c8] sm:$0xff] %v695
    %824 = vst [vmem:[#allocation8 + $0x3d0] sm:$0xff] %v696
    %825 = vst [vmem:[#allocation8 + $0x3d8] sm:$0xff] %v697
    %826 = vst [vmem:[#allocation8 + $0x3e0] sm:$0xff] %v698
    %827 = vst [vmem:[#allocation8 + $0x3e8] sm:$0xff] %v699
    %828 = vst [vmem:[#allocation8 + $0x3f0] sm:$0xff] %v700
    %829 = vst [vmem:[#allocation8 + $0x3f8] sm:$0xff] %v701
    // Predicated region
    $region26: #{tpu_custom_call.1} parent=1 // pred_check
      _
    $region27: #{tpu_custom_call.1} parent=1 // pred_check_branch
      %831 = sbr.rel (0) target = $region29
    $region28: #{tpu_custom_call.1} parent=1 // pred_region
      %833 = vsyncadd [#allocation4], 0
      %s834 = sshll.u32 [#allocation8], 4
      %s835 = int_to_ptr.vmem [resolvable:$true] %s834
      %s836 = sshll.u32 %s3, 4
      %s837 = int_to_ptr.hbm [resolvable:$true] %s836
      %842 = dma.vmem_to_hbm [thread:$0]  %s835, 16384, %s837, [#allocation4], 128, 128, 8
    $region29: #{tpu_custom_call.1} parent=1 // pred_fallthru
      _
    // Predicated region
    $region30: #{tpu_custom_call.1} parent=1 // pred_check
      _
    $region31: #{tpu_custom_call.1} parent=1 // pred_check_branch
      %844 = sbr.rel (0) target = $region33
    $region32: #{tpu_custom_call.1} parent=1 // pred_region
      %846 = dma.done [#allocation4], 16384
    $region33: #{tpu_custom_call.1} parent=1 // pred_fallthru
      _
    %847 = vsyncpa [#allocation3], 1
    %848 = vsyncpa [#allocation6], 1
    %849 = vsyncpa [#allocation4], 1

</llo_original>
